<compile_context>
chip_gen: v6e
topology: v6e:2x2x1
jax: 0.10.0
libtpu: 0.0.40
codegen_flags: <defaults>
</compile_context>

<pallas_src>
import functools

import jax
import jax.numpy as jnp
from jax.experimental import pallas as pl
from jax.experimental.pallas import tpu as pltpu


def block2d_kernel(x_ref, w_ref, b_ref, o_ref, *, TH, W, K, KKC, KKC_P, COUT_P, slope):
    """One (row-tile, batch) grid step.

    x_ref : (1, TH+2*PAD, W+2*PAD, CIN) bf16  padded input window (auto double-buffered)
    w_ref : (KKC_P, COUT_P) bf16              BN-scale-folded im2col weight (constant block)
    b_ref : (TH, W, COUT_P) bf16              edge-aware BN-shift bias row tile
    o_ref : (1, TH, W, COUT_P)                output row tile (lane-dense, 128 lanes)
    """
    xwin = x_ref[0]                                           # (THP, Wp, CIN)

    # im2col as a value: no scratch write/re-read, no masked col stores.
    cols = [xwin[kh:kh + TH, kw:kw + W, :] for kh in range(K) for kw in range(K)]
    if KKC_P > KKC:
        # Pad the contraction up to the 128-lane MXU-native granularity.
        cols.append(jnp.zeros((TH, W, KKC_P - KKC), jnp.bfloat16))
    patch = jnp.concatenate(cols, axis=-1).reshape(TH * W, KKC_P)

    # Single MXU matmul per step: bf16 operands, f32 accumulation.
    acc = jnp.dot(patch, w_ref[...], preferred_element_type=jnp.float32)

    # BN-shift bias (position dependent only at the borders) + LeakyReLU, in f32.
    y = acc.reshape(TH, W, COUT_P) + b_ref[...].astype(jnp.float32)
    y = jnp.where(y >= 0.0, y, slope * y)
    o_ref[0] = y.astype(o_ref.dtype)


def block2d_forward(x_nchw, conv_w, gamma, beta, eps=1e-5, slope=0.1,
                    row_tile=8, out_dtype=None):
    """Forward of Block2D.  x_nchw: (N, CIN, H, W), conv_w: (COUT, CIN, K, K)."""
    N, CIN, H, W = x_nchw.shape
    COUT, _, K, _ = conv_w.shape
    PAD = K // 2                              # padding_same_value(kernel, dilation=1)
    LANES = 128
    COUT_P = ((COUT + LANES - 1) // LANES) * LANES
    KKC = K * K * CIN
    KKC_P = ((KKC + LANES - 1) // LANES) * LANES
    out_dtype = x_nchw.dtype if out_dtype is None else out_dtype

    TH = row_tile
    R = -(-H // TH)                           # ceil: no TH = H fallback any more
    H_t = R * TH                              # row-padded height, sliced off at the end
    THP = TH + 2 * PAD
    Wp = W + 2 * PAD

    # --- training-mode BatchNorm2d batch statistics, accumulated in f32.
    xf = x_nchw.astype(jnp.float32)
    mean = jnp.mean(xf, axis=(0, 2, 3))
    var = jnp.mean(jnp.square(xf - mean[None, :, None, None]), axis=(0, 2, 3))
    scale = gamma.astype(jnp.float32) / jnp.sqrt(var + eps)          # (CIN,)
    shift = beta.astype(jnp.float32) - mean * scale                  # (CIN,)

    # --- fold the BN scale into the conv weight (HWIO), pad COUT and the contraction
    #     to the 128-lane width, reshape to the im2col layout, cast to bf16 for the MXU.
    w_hwio = jnp.transpose(conv_w, (2, 3, 1, 0)).astype(jnp.float32)  # (K,K,CIN,COUT)
    w_fold = w_hwio * scale[None, None, :, None]
    w_fold = jnp.pad(w_fold, ((0, 0), (0, 0), (0, 0), (0, COUT_P - COUT)))
    w_im2col = w_fold.reshape(KKC, COUT_P)
    w_im2col = jnp.pad(w_im2col, ((0, KKC_P - KKC), (0, 0))).astype(jnp.bfloat16)

    # --- BN shift contributes sum_{valid taps} w*shift; the valid-tap set only varies
    #     at the borders (zero 'same' padding is applied AFTER BatchNorm).  Validity is
    #     based on the real H/W; rows >= H are wrapper padding and get sliced off.
    b_tap = jnp.einsum('klic,i->klc', w_hwio, shift)                  # (K,K,COUT)
    hh = jnp.arange(H_t)[:, None] + jnp.arange(K)[None, :] - PAD
    ww = jnp.arange(W)[:, None] + jnp.arange(K)[None, :] - PAD
    rv = ((hh >= 0) & (hh < H)).astype(jnp.float32)                   # (H_t,K)
    cv = ((ww >= 0) & (ww < W)).astype(jnp.float32)                   # (W,K)
    bias = jnp.einsum('hk,wl,klc->hwc', rv, cv, b_tap)                # (H_t,W,COUT)
    bias = jnp.pad(bias, ((0, 0), (0, 0), (0, COUT_P - COUT))).astype(jnp.bfloat16)

    # --- NHWC, zero 'same' padding + row-tile padding done once; bf16 halves DMA bytes.
    x_nhwc = jnp.transpose(xf, (0, 2, 3, 1))
    x_pad = jnp.pad(x_nhwc, ((0, 0), (PAD, PAD + (H_t - H)), (PAD, PAD), (0, 0)))
    x_pad = x_pad.astype(jnp.bfloat16)                       # (N, H_t+2*PAD, Wp, CIN)

    # --- overlapping row windows (halo rows duplicated) so the kernel's input fetch is
    #     a plain Blocked BlockSpec that the Pallas pipeline double-buffers.
    x_win = jnp.stack([x_pad[:, r * TH:r * TH + THP] for r in range(R)], axis=1)
    x_win = x_win.reshape(N * R, THP, Wp, CIN)

    kernel = functools.partial(block2d_kernel, TH=TH, W=W, K=K,
                               KKC=KKC, KKC_P=KKC_P, COUT_P=COUT_P, slope=slope)

    out_full = pl.pallas_call(
        kernel,
        out_shape=jax.ShapeDtypeStruct((N, H_t, W, COUT_P), out_dtype),
        grid_spec=pltpu.PrefetchScalarGridSpec(
            num_scalar_prefetch=0,
            # r outer, n inner: bias block index is constant across the batch sweep
            # (fetched once per row tile), and the grid extent R*N feeds both v7x TCs.
            grid=(R, N),
            in_specs=[
                pl.BlockSpec((1, THP, Wp, CIN),
                             lambda r, n: (n * R + r, 0, 0, 0)),      # input window
                pl.BlockSpec((KKC_P, COUT_P), lambda r, n: (0, 0)),   # weight (resident)
                pl.BlockSpec((TH, W, COUT_P), lambda r, n: (r, 0, 0)),  # bias row tile
            ],
            out_specs=pl.BlockSpec((1, TH, W, COUT_P),
                                   lambda r, n: (n, r, 0, 0)),
        ),
        compiler_params=pltpu.CompilerParams(
            dimension_semantics=("parallel", "parallel"),
            vmem_limit_bytes=64 * 1024 * 1024),
    )(x_win, w_im2col, bias)

    out_nhwc = out_full[:, :H, :, :COUT]            # drop row-tile + COUT lane padding
    return jnp.transpose(out_nhwc, (0, 3, 1, 2)).astype(x_nchw.dtype)   # back to NCHW


def block2d_ref(x, conv_w, gamma, beta, eps=1e-5, slope=0.1):
    """Pure-JAX reference (mirrors the PyTorch module in training mode)."""
    mean = jnp.mean(x, axis=(0, 2, 3), keepdims=True)
    var = jnp.mean((x - mean) ** 2, axis=(0, 2, 3), keepdims=True)
    xn = (x - mean) / jnp.sqrt(var + eps)
    xn = xn * gamma[None, :, None, None] + beta[None, :, None, None]
    pad = conv_w.shape[-1] // 2
    y = jax.lax.conv_general_dilated(
        xn, conv_w, window_strides=(1, 1), padding=((pad, pad), (pad, pad)),
        dimension_numbers=('NCHW', 'OIHW', 'NCHW'))
    return jnp.where(y >= 0, y, slope * y)


if __name__ == "__main__":
    N, CIN, COUT, H, W, K = 2, 4, 8, 16, 16, 3

    key = jax.random.PRNGKey(0)
    kx, kw = jax.random.split(key)

    x = jax.random.normal(kx, (N, CIN, H, W), jnp.float32)

    # Deterministic parameter init (xavier-uniform conv weight, BN gamma=1, beta=0).
    fan_in, fan_out = CIN * K * K, COUT * K * K
    bound = (6.0 / (fan_in + fan_out)) ** 0.5
    conv_w = jax.random.uniform(kw, (COUT, CIN, K, K), jnp.float32, -bound, bound)
    gamma = jnp.ones((CIN,), jnp.float32)
    beta = jnp.zeros((CIN,), jnp.float32)

    out = block2d_forward(x, conv_w, gamma, beta)
    out = jax.block_until_ready(out)

    ref = block2d_ref(x, conv_w, gamma, beta)
    assert out.shape == (N, COUT, H, W)
    # bf16 MXU operands / bf16 bias vs. f32 reference -> relaxed tolerance.
    if not bool(jnp.allclose(out, ref, atol=2e-2, rtol=2e-2)):
        raise AssertionError("Pallas Block2D output mismatches JAX reference")

    print("KERNEL_OK")
</pallas_src>

<mosaic_0001>
module attributes {stable_mosaic.version = 11 : i64} {
  func.func @block2d_kernel(%arg0: i32, %arg1: i32, %arg2: memref<1x10x18x4xbf16, #tpu.memory_space<vmem>>, %arg3: memref<128x128xbf16, #tpu.memory_space<vmem>>, %arg4: memref<8x16x128xbf16, #tpu.memory_space<vmem>>, %arg5: memref<1x8x16x128xf32, #tpu.memory_space<vmem>>) attributes {dimension_semantics = [#tpu.dimension_semantics<parallel>, #tpu.dimension_semantics<parallel>], iteration_bounds = array<i64: 2, 2>, scalar_prefetch = 0 : i64, scratch_operands = 0 : i64, tpu.core_type = #tpu.core_type<tc>, window_params = [{transform_indices = @transform_0, window_bounds = array<i64: 1, 10, 18, 4>}, {pipeline_mode = #tpu.pipeline_mode<synchronous>, transform_indices = @transform_1, window_bounds = array<i64: 128, 128>}, {transform_indices = @transform_2, window_bounds = array<i64: 8, 16, 128>}, {transform_indices = @transform_3, window_bounds = array<i64: 1, 8, 16, 128>}]} {
    %c0 = arith.constant 0 : index
    %c0_0 = arith.constant 0 : index
    %c0_1 = arith.constant 0 : index
    %c0_2 = arith.constant 0 : index
    %0 = vector.load %arg2[%c0, %c0_0, %c0_1, %c0_2] : memref<1x10x18x4xbf16, #tpu.memory_space<vmem>>, vector<1x10x18x4xbf16>
    %1 = vector.shape_cast %0 : vector<1x10x18x4xbf16> to vector<10x18x4xbf16>
    %2 = vector.extract_strided_slice %1 {offsets = [0, 0, 0], sizes = [8, 16, 4], strides = [1, 1, 1]} : vector<10x18x4xbf16> to vector<8x16x4xbf16>
    %3 = vector.extract_strided_slice %1 {offsets = [0, 1, 0], sizes = [8, 16, 4], strides = [1, 1, 1]} : vector<10x18x4xbf16> to vector<8x16x4xbf16>
    %4 = vector.extract_strided_slice %1 {offsets = [0, 2, 0], sizes = [8, 16, 4], strides = [1, 1, 1]} : vector<10x18x4xbf16> to vector<8x16x4xbf16>
    %5 = vector.extract_strided_slice %1 {offsets = [1, 0, 0], sizes = [8, 16, 4], strides = [1, 1, 1]} : vector<10x18x4xbf16> to vector<8x16x4xbf16>
    %6 = vector.extract_strided_slice %1 {offsets = [1, 1, 0], sizes = [8, 16, 4], strides = [1, 1, 1]} : vector<10x18x4xbf16> to vector<8x16x4xbf16>
    %7 = vector.extract_strided_slice %1 {offsets = [1, 2, 0], sizes = [8, 16, 4], strides = [1, 1, 1]} : vector<10x18x4xbf16> to vector<8x16x4xbf16>
    %8 = vector.extract_strided_slice %1 {offsets = [2, 0, 0], sizes = [8, 16, 4], strides = [1, 1, 1]} : vector<10x18x4xbf16> to vector<8x16x4xbf16>
    %9 = vector.extract_strided_slice %1 {offsets = [2, 1, 0], sizes = [8, 16, 4], strides = [1, 1, 1]} : vector<10x18x4xbf16> to vector<8x16x4xbf16>
    %10 = vector.extract_strided_slice %1 {offsets = [2, 2, 0], sizes = [8, 16, 4], strides = [1, 1, 1]} : vector<10x18x4xbf16> to vector<8x16x4xbf16>
    %cst = arith.constant 0.000000e+00 : bf16
    %11 = vector.broadcast %cst : bf16 to vector<8x16x92xbf16>
    %12 = tpu.concatenate %2, %3, %4, %5, %6, %7, %8, %9, %10, %11 in 2 : vector<8x16x4xbf16>, vector<8x16x4xbf16>, vector<8x16x4xbf16>, vector<8x16x4xbf16>, vector<8x16x4xbf16>, vector<8x16x4xbf16>, vector<8x16x4xbf16>, vector<8x16x4xbf16>, vector<8x16x4xbf16>, vector<8x16x92xbf16> -> vector<8x16x128xbf16>
    %13 = vector.shape_cast %12 : vector<8x16x128xbf16> to vector<128x128xbf16>
    %c0_3 = arith.constant 0 : index
    %c0_4 = arith.constant 0 : index
    %14 = vector.load %arg3[%c0_3, %c0_4] : memref<128x128xbf16, #tpu.memory_space<vmem>>, vector<128x128xbf16>
    %cst_5 = arith.constant dense<0.000000e+00> : vector<128x128xf32>
    %15 = tpu.matmul %13, %14, %cst_5 {dimension_numbers = #tpu.dot_dimension_numbers<[1], [0], [0], [1], [0, 0, 1, 1], [], []>} : vector<128x128xbf16>, vector<128x128xbf16>, vector<128x128xf32> -> vector<128x128xf32>
    %16 = vector.shape_cast %15 : vector<128x128xf32> to vector<8x16x128xf32>
    %c0_6 = arith.constant 0 : index
    %c0_7 = arith.constant 0 : index
    %c0_8 = arith.constant 0 : index
    %17 = vector.load %arg4[%c0_6, %c0_7, %c0_8] : memref<8x16x128xbf16, #tpu.memory_space<vmem>>, vector<8x16x128xbf16>
    %18 = arith.extf %17 : vector<8x16x128xbf16> to vector<8x16x128xf32>
    %19 = arith.addf %16, %18 : vector<8x16x128xf32>
    %cst_9 = arith.constant 0.000000e+00 : f32
    %20 = vector.broadcast %cst_9 : f32 to vector<8x16x128xf32>
    %21 = arith.cmpf oge, %19, %20 : vector<8x16x128xf32>
    %cst_10 = arith.constant 1.000000e-01 : f32
    %22 = vector.broadcast %cst_10 : f32 to vector<8x16x128xf32>
    %23 = arith.mulf %22, %19 : vector<8x16x128xf32>
    %24 = arith.select %21, %19, %23 : vector<8x16x128xi1>, vector<8x16x128xf32>
    %c0_11 = arith.constant 0 : index
    %c0_12 = arith.constant 0 : index
    %c0_13 = arith.constant 0 : index
    %c0_14 = arith.constant 0 : index
    %25 = vector.load %arg5[%c0_11, %c0_12, %c0_13, %c0_14] : memref<1x8x16x128xf32, #tpu.memory_space<vmem>>, vector<1x8x16x128xf32>
    %26 = vector.shape_cast %25 : vector<1x8x16x128xf32> to vector<8x16x128xf32>
    %27 = vector.shape_cast %24 : vector<8x16x128xf32> to vector<1x8x16x128xf32>
    tpu.vector_store %arg5[%c0_11, %c0_12, %c0_13, %c0_14], %27 {strides = array<i32>} : memref<1x8x16x128xf32, #tpu.memory_space<vmem>>, vector<1x8x16x128xf32>,
    return
  }
  func.func @transform_0(%arg0: i32, %arg1: i32) -> (i32, i32, i32, i32) {
    %c2_i32 = arith.constant 2 : i32
    %0 = arith.muli %arg1, %c2_i32 : i32
    %1 = arith.addi %0, %arg0 : i32
    %c0_i32 = arith.constant 0 : i32
    %c0_i32_0 = arith.constant 0 : i32
    %c0_i32_1 = arith.constant 0 : i32
    %c0_i32_2 = arith.constant 0 : i32
    return %1, %c0_i32, %c0_i32_0, %c0_i32_1 : i32, i32, i32, i32
  }
  func.func @transform_1(%arg0: i32, %arg1: i32) -> (i32, i32) {
    %c0_i32 = arith.constant 0 : i32
    %c0_i32_0 = arith.constant 0 : i32
    %c0_i32_1 = arith.constant 0 : i32
    return %c0_i32, %c0_i32_0 : i32, i32
  }
  func.func @transform_2(%arg0: i32, %arg1: i32) -> (i32, i32, i32) {
    %c0_i32 = arith.constant 0 : i32
    %c0_i32_0 = arith.constant 0 : i32
    %c0_i32_1 = arith.constant 0 : i32
    return %arg0, %c0_i32, %c0_i32_0 : i32, i32, i32
  }
  func.func @transform_3(%arg0: i32, %arg1: i32) -> (i32, i32, i32, i32) {
    %c0_i32 = arith.constant 0 : i32
    %c0_i32_0 = arith.constant 0 : i32
    %c0_i32_1 = arith.constant 0 : i32
    return %arg1, %arg0, %c0_i32, %c0_i32_0 : i32, i32, i32, i32
  }
}

</mosaic_0001>

<llo_original>
// kernel: tpu_custom_call.1
$region0: #{tpu_custom_call.1}
  #allocation0 [shape = 'u32[]', space=smem, size = 0x4, offset = 0x4, fixed_abs, tag = 'smem constant byte address 0x4 - core index']
  #allocation1 [shape = 'u32[144,128]{1,0:T(1,128)}', space=vmem, size = 0x12000, scoped, tag = 'internal scratch']
  %s0 = inlined_call_operand.vmem [shape: bf16[4,10,18,4], index: 0, kind: input, shape index: {}]
  %s1 = inlined_call_operand.vmem [shape: bf16[128,128], index: 1, kind: input, shape index: {}]
  %s2 = inlined_call_operand.vmem [shape: bf16[16,16,128], index: 2, kind: input, shape index: {}]
  %s3 = inlined_call_operand.hbm [shape: f32[2,16,16,128], index: 3, kind: output, shape index: {}]
  %s4 = sld [smem:[#allocation0]]
  $region45: #{tpu_custom_call.1} parent=0
    _
  %s6 = ssub.s32 1, %s4
  %s7 = scalar_select 0, %s6, %s4
  $region1: #{tpu_custom_call.1} parent=0
    #allocation2 [shape = 'u8[131072]{0}', space=vmem, size = 0x20000, scoped, tag = 'output window, operand 0']
    #allocation3 [shape = 's32[2]{0}', space=sflag, size = 0x8, scoped, tag = 'scoped memory for tpu_custom_call.1']
    %8 = vsyncpa [#allocation3], 0
    %s9 = scalar_lea.sflag [#allocation3], 1
    %10 = vsyncpa %s9, 0
    loop: start=0, step=1, limit=6
    $region2: #{tpu_custom_call.1} parent=1 // loop_pre_header
      _
    $region3: #{tpu_custom_call.1} parent=1 // loop_header
      %s12 = sphi 0, %s16
      %p13 = scmp.ge.s32.totalorder %s12, 6
      %s19 = sphi 0, %s31
      %s20 = sphi 0, %s27
      %s21 = sphi 0, %s19
      %s22 = sphi 0, %s20
      %s23 = sphi 0, %s21
      %s24 = sphi 0, %s22
      %s38 = sphi 0, %s40
      %s41 = sphi 0, %s38
      %s42 = sphi 0, %s41
      %s58 = sphi 0, %s42
      %s62 = sphi 0, %s62
      %s64 = sphi 0, %s62
      %s65 = sphi 0, %s64
      %s79 = sphi 0, %s65
      %s85 = sphi 0, %s87
      %s88 = sphi 0, %s85
      %s89 = sphi 0, %s88
      %s105 = sphi 0, %s89
      %s113 = sphi 0, %s115
      %s116 = sphi 0, %s113
      %s117 = sphi 0, %s116
      %s133 = sphi 0, %s117
    $region4: #{tpu_custom_call.1} parent=1 // loop_header_branch
      %15 = sbr.rel (%p13) target = $region8
    $region5: #{tpu_custom_call.1} parent=1 // loop_body
      %s17 = ssub.s32 %s12, 1
      %s18 = ssub.s32 %s12, 2
      %s25 = sadd.s32 1, %s20
      %p26 = scmp.ge.s32.totalorder %s25, 2
      %s27 = scalar_select %p26, 0, %s25
      %s28 = sadd.s32 1, %s19
      %s29 = scalar_select %p26, %s28, %s19
      %p30 = scmp.ge.s32.totalorder %s29, 2
      %s31 = scalar_select %p30, 0, %s29
      %s32 = smul.u32 %s20, 2
      %s33 = sadd.s32 %s32, %s19
      %s34 = smul.u32 %s27, 2
      %s35 = sadd.s32 %s34, %s31
      %s36 = ssub.s32 %s33, %s35
      %p37 = scmp.eq.s32.totalorder %s36, 0
      %s39 = sadd.s32 %s38, 1
      %s40 = scalar_select %p37, %s38, %s39
      %p43 = pneg %p37
      %p44 = scmp.eq.s32.totalorder %s12, 3
      %p45 = por %p43, %p44
      %p46 = scmp.ne.s32.totalorder %s38, %s41
      %p47 = scmp.eq.s32.totalorder %s12, 0
      %p48 = por %p46, %p47
      %p49 = scmp.ne.s32.totalorder %s38, %s41
      %p50 = scmp.eq.s32.totalorder %s17, 3
      %p51 = por %p49, %p50
      %p52 = scmp.ne.s32.totalorder %s41, %s42
      %p53 = scmp.eq.s32.totalorder %s17, 0
      %p54 = por %p52, %p53
      %p55 = scmp.ne.s32.totalorder %s41, %s42
      %p56 = scmp.eq.s32.totalorder %s18, 3
      %p57 = por %p55, %p56
      %p59 = scmp.ne.s32.totalorder %s42, %s58
      %p60 = scmp.eq.s32.totalorder %s18, 0
      %p61 = por %p59, %p60
      %s63 = sadd.s32 %s62, 1
      %p66 = scmp.eq.s32.totalorder %s12, 3
      %p67 = scmp.ne.s32.totalorder %s62, %s64
      %p68 = scmp.eq.s32.totalorder %s12, 0
      %p69 = por %p67, %p68
      %p70 = scmp.ne.s32.totalorder %s62, %s64
      %p71 = scmp.eq.s32.totalorder %s17, 3
      %p72 = por %p70, %p71
      %p73 = scmp.ne.s32.totalorder %s64, %s65
      %p74 = scmp.eq.s32.totalorder %s17, 0
      %p75 = por %p73, %p74
      %p76 = scmp.ne.s32.totalorder %s64, %s65
      %p77 = scmp.eq.s32.totalorder %s18, 3
      %p78 = por %p76, %p77
      %p80 = scmp.ne.s32.totalorder %s65, %s79
      %p81 = scmp.eq.s32.totalorder %s18, 0
      %p82 = por %p80, %p81
      %s83 = ssub.s32 %s19, %s31
      %p84 = scmp.eq.s32.totalorder %s83, 0
      %s86 = sadd.s32 %s85, 1
      %s87 = scalar_select %p84, %s85, %s86
      %p90 = pneg %p84
      %p91 = scmp.eq.s32.totalorder %s12, 3
      %p92 = por %p90, %p91
      %p93 = scmp.ne.s32.totalorder %s85, %s88
      %p94 = scmp.eq.s32.totalorder %s12, 0
      %p95 = por %p93, %p94
      %p96 = scmp.ne.s32.totalorder %s85, %s88
      %p97 = scmp.eq.s32.totalorder %s17, 3
      %p98 = por %p96, %p97
      %p99 = scmp.ne.s32.totalorder %s88, %s89
      %p100 = scmp.eq.s32.totalorder %s17, 0
      %p101 = por %p99, %p100
      %p102 = scmp.ne.s32.totalorder %s88, %s89
      %p103 = scmp.eq.s32.totalorder %s18, 3
      %p104 = por %p102, %p103
      %p106 = scmp.ne.s32.totalorder %s89, %s105
      %p107 = scmp.eq.s32.totalorder %s18, 0
      %p108 = por %p106, %p107
      %s109 = ssub.s32 %s20, %s27
      %s110 = ssub.s32 %s19, %s31
      %s111 = sor.u32 %s109, %s110
      %p112 = scmp.eq.s32.totalorder %s111, 0
      %s114 = sadd.s32 %s113, 1
      %s115 = scalar_select %p112, %s113, %s114
      %p118 = pneg %p112
      %p119 = scmp.eq.s32.totalorder %s12, 3
      %p120 = por %p118, %p119
      %p121 = scmp.ne.s32.totalorder %s113, %s116
      %p122 = scmp.eq.s32.totalorder %s12, 0
      %p123 = por %p121, %p122
      %p124 = scmp.ne.s32.totalorder %s113, %s116
      %p125 = scmp.eq.s32.totalorder %s17, 3
      %p126 = por %p124, %p125
      %p127 = scmp.ne.s32.totalorder %s116, %s117
      %p128 = scmp.eq.s32.totalorder %s17, 0
      %p129 = por %p127, %p128
      %p130 = scmp.ne.s32.totalorder %s116, %s117
      %p131 = scmp.eq.s32.totalorder %s18, 3
      %p132 = por %p130, %p131
      %p134 = scmp.ne.s32.totalorder %s117, %s133
      %p135 = scmp.eq.s32.totalorder %s18, 0
      %p136 = por %p134, %p135
      %p137 = scmp.le.s32.totalorder 1, %s12
      %p138 = scmp.lt.s32.totalorder %s12, 5
      %p139 = pnand %p137, %p138
      %p140 = pneg %p139
      // Predicated region
      $region9: #{tpu_custom_call.1} parent=5 // pred_check
        _
      $region10: #{tpu_custom_call.1} parent=5 // pred_check_branch
        %142 = sbr.rel (%p139) target = $region12
      $region11: #{tpu_custom_call.1} parent=5 // pred_region
        %s143 = ssub.s32 %s12, 1
        // Predicated region
        $region13: #{tpu_custom_call.1} parent=11 // pred_check
          %p144 = pneg %p75
        $region14: #{tpu_custom_call.1} parent=11 // pred_check_branch
          %146 = sbr.rel (%p144) target = $region16
        $region15: #{tpu_custom_call.1} parent=11 // pred_region
          _
        $region16: #{tpu_custom_call.1} parent=11 // pred_fallthru
          _
      $region12: #{tpu_custom_call.1} parent=5 // pred_fallthru
        _
      %p147 = scmp.lt.s32.totalorder %s12, 4
      // Predicated region
      $region17: #{tpu_custom_call.1} parent=5 // pred_check
        %p148 = pneg %p147
      $region18: #{tpu_custom_call.1} parent=5 // pred_check_branch
        %150 = sbr.rel (%p148) target = $region20
      $region19: #{tpu_custom_call.1} parent=5 // pred_region
        // Predicated region
        $region21: #{tpu_custom_call.1} parent=19 // pred_check
          %p151 = pneg %p48
        $region22: #{tpu_custom_call.1} parent=19 // pred_check_branch
          %153 = sbr.rel (%p151) target = $region24
        $region23: #{tpu_custom_call.1} parent=19 // pred_region
          %s154 = smul.u32 %s20, 2
          %s155 = sadd.s32 %s154, %s19
          %p156 = scmp.lt.s32.totalorder %s155, 3
          %s157 = scalar_select %p156, %s155, 3
          %s158 = smul.addr %s157, 30
          %s159 = smul.addr %s158, 4
          %s160 = scalar_lea.vmem %s0, %s159
          %s161 = smul.u32 %s20, 2
          %s162 = sadd.s32 %s161, %s19
        $region24: #{tpu_custom_call.1} parent=19 // pred_fallthru
          _
        // Predicated region
        $region25: #{tpu_custom_call.1} parent=19 // pred_check
          %p163 = pneg %p95
        $region26: #{tpu_custom_call.1} parent=19 // pred_check_branch
          %165 = sbr.rel (%p163) target = $region28
        $region27: #{tpu_custom_call.1} parent=19 // pred_region
          %s166 = smul.u32 8, %s19
          %p167 = scmp.lt.s32.totalorder %s166, 15
          %s168 = scalar_select %p167, %s166, 15
          %s169 = smul.addr %s168, 2
          %s170 = smul.addr %s169, 4
          %s171 = scalar_lea.vmem %s2, %s170
          %s172 = smul.u32 8, %s19
        $region28: #{tpu_custom_call.1} parent=19 // pred_fallthru
          _
      $region20: #{tpu_custom_call.1} parent=5 // pred_fallthru
        _
      %p173 = scmp.le.s32.totalorder 1, %s12
      %p174 = scmp.lt.s32.totalorder %s12, 5
      %p175 = pnand %p173, %p174
      %p176 = pneg %p175
      // Predicated region
      $region29: #{tpu_custom_call.1} parent=5 // pred_check
        _
      $region30: #{tpu_custom_call.1} parent=5 // pred_check_branch
        %178 = sbr.rel (%p175) target = $region32
      $region31: #{tpu_custom_call.1} parent=5 // pred_region
        %s179 = ssub.s32 %s12, 1
        %s180 = smul.u32 %s22, 2
        %s181 = sadd.s32 %s180, %s21
        %p182 = scmp.lt.s32.totalorder %s181, 3
        %s183 = scalar_select %p182, %s181, 3
        %s184 = smul.addr %s183, 30
        %s185 = smul.addr %s184, 4
        %s186 = scalar_lea.vmem %s0, %s185
        %p187 = pneg %p54
        %p188 = pneg %p51
        %p189 = pneg %p75
        %p190 = pneg %p72
        %s191 = smul.u32 8, %s21
        %p192 = scmp.lt.s32.totalorder %s191, 15
        %s193 = scalar_select %p192, %s191, 15
        %s194 = smul.addr %s193, 2
        %s195 = smul.addr %s194, 4
        %s196 = scalar_lea.vmem %s2, %s195
        %p197 = pneg %p101
        %p198 = pneg %p98
        %p199 = pneg %p129
        %p200 = pneg %p126
        %s201 = sand.u32 %s116, 1
        %s202 = scalar_lea.sflag [#allocation3], %s201
        %s203 = sand.u32 %s116, 1
        %s204 = smul.addr %s203, 128
        %s205 = scalar_lea.vmem [#allocation2], %s204
        %s206 = smul.u32 %s22, 2
        %s207 = sadd.s32 %s206, %s21
        %p208 = scmp.lt.s32.totalorder %s207, 3
        %s209 = scalar_select %p208, %s207, 3
        %s210 = smul.addr %s209, 30
        %s211 = smul.addr %s210, 4
        %s212 = scalar_lea.vmem %s0, %s211
        %s213 = smul.u32 %s22, 2
        %s214 = sadd.s32 %s213, %s21
        %s215 = smul.u32 8, %s21
        %p216 = scmp.lt.s32.totalorder %s215, 15
        %s217 = scalar_select %p216, %s215, 15
        %s218 = smul.addr %s217, 2
        %s219 = smul.addr %s218, 4
        %s220 = scalar_lea.vmem %s2, %s219
        %s221 = smul.u32 8, %s21
        %s222 = smul.u32 8, %s21
        %v224 = vld [vmem:[%s212] sm:$0xf]
        %v225 = vld [vmem:[%s212 + $0x4] sm:$0xf]
        %v226 = vld [vmem:[%s212 + $0x8] sm:$0x1]
        %v227 = vld [vmem:[%s212 + $0xc] sm:$0xf]
        %v228 = vld [vmem:[%s212 + $0x10] sm:$0xf]
        %v229 = vld [vmem:[%s212 + $0x14] sm:$0x1]
        %v230 = vld [vmem:[%s212 + $0x18] sm:$0xf]
        %v231 = vld [vmem:[%s212 + $0x1c] sm:$0xf]
        %v232 = vld [vmem:[%s212 + $0x20] sm:$0x1]
        %v233 = vld [vmem:[%s212 + $0x24] sm:$0xf]
        %v234 = vld [vmem:[%s212 + $0x28] sm:$0xf]
        %v235 = vld [vmem:[%s212 + $0x2c] sm:$0x1]
        %v236 = vld [vmem:[%s212 + $0x30] sm:$0xf]
        %v237 = vld [vmem:[%s212 + $0x34] sm:$0xf]
        %v238 = vld [vmem:[%s212 + $0x38] sm:$0x1]
        %v239 = vld [vmem:[%s212 + $0x3c] sm:$0xf]
        %v240 = vld [vmem:[%s212 + $0x40] sm:$0xf]
        %v241 = vld [vmem:[%s212 + $0x44] sm:$0x1]
        %v242 = vld [vmem:[%s212 + $0x48] sm:$0xf]
        %v243 = vld [vmem:[%s212 + $0x4c] sm:$0xf]
        %v244 = vld [vmem:[%s212 + $0x50] sm:$0x1]
        %v245 = vld [vmem:[%s212 + $0x54] sm:$0xf]
        %v246 = vld [vmem:[%s212 + $0x58] sm:$0xf]
        %v247 = vld [vmem:[%s212 + $0x5c] sm:$0x1]
        %v248 = vld [vmem:[%s212 + $0x60] sm:$0xf]
        %v249 = vld [vmem:[%s212 + $0x64] sm:$0xf]
        %v250 = vld [vmem:[%s212 + $0x68] sm:$0x1]
        %v251 = vld [vmem:[%s212 + $0x6c] sm:$0xf]
        %v252 = vld [vmem:[%s212 + $0x70] sm:$0xf]
        %v253 = vld [vmem:[%s212 + $0x74] sm:$0x1]
        %v270 = vunpack.c.l.b16 %v224
        %v271 = vunpack.c.l.b16 %v225
        %v272 = vunpack.c.l.b16 %v227
        %v273 = vunpack.c.l.b16 %v228
        %v274 = vunpack.c.l.b16 %v230
        %v275 = vunpack.c.l.b16 %v231
        %v276 = vunpack.c.l.b16 %v233
        %v277 = vunpack.c.l.b16 %v234
        %v278 = vunpack.c.l.b16 %v236
        %v279 = vunpack.c.l.b16 %v237
        %v280 = vunpack.c.l.b16 %v239
        %v281 = vunpack.c.l.b16 %v240
        %v282 = vunpack.c.l.b16 %v242
        %v283 = vunpack.c.l.b16 %v243
        %v284 = vunpack.c.l.b16 %v245
        %v285 = vunpack.c.l.b16 %v246
        %v286 = vpack.c.b16 %v271, %v270
        %v287 = vpack.c.b16 %v273, %v272
        %v288 = vpack.c.b16 %v275, %v274
        %v289 = vpack.c.b16 %v277, %v276
        %v290 = vpack.c.b16 %v279, %v278
        %v291 = vpack.c.b16 %v281, %v280
        %v292 = vpack.c.b16 %v283, %v282
        %v293 = vpack.c.b16 %v285, %v284
        %v302 = vunpack.c.l.b16 %v226
        %v303 = vunpack.c.l.b16 %v229
        %v304 = vunpack.c.l.b16 %v232
        %v305 = vunpack.c.l.b16 %v235
        %v306 = vunpack.c.l.b16 %v238
        %v307 = vunpack.c.l.b16 %v241
        %v308 = vunpack.c.l.b16 %v244
        %v309 = vunpack.c.l.b16 %v247
        %v310 = vpack.c.b16 %v302, %v302
        %v311 = vpack.c.b16 %v303, %v303
        %v312 = vpack.c.b16 %v304, %v304
        %v313 = vpack.c.b16 %v305, %v305
        %v314 = vpack.c.b16 %v306, %v306
        %v315 = vpack.c.b16 %v307, %v307
        %v316 = vpack.c.b16 %v308, %v308
        %v317 = vpack.c.b16 %v309, %v309
        %vm318 = vsmask.f32 7424
        %v320 = vshrl.u32 %v286, 16
        %v322 = vshll.u32 %v286, 16
        %v324 = vrot.slane %v322, 1
        %v325 = vor.u32 %v320, %v324
        %v327 = vshll.u32 %v310, 16
        %v329 = vrot.slane %v327, 1
        %v330 = vsel %vm318, %v325, %v329
        %v332 = vshrl.u32 %v287, 16
        %v334 = vshll.u32 %v287, 16
        %v336 = vrot.slane %v334, 1
        %v337 = vor.u32 %v332, %v336
        %v339 = vshll.u32 %v311, 16
        %v341 = vrot.slane %v339, 1
        %v342 = vsel %vm318, %v337, %v341
        %v344 = vshrl.u32 %v288, 16
        %v346 = vshll.u32 %v288, 16
        %v348 = vrot.slane %v346, 1
        %v349 = vor.u32 %v344, %v348
        %v351 = vshll.u32 %v312, 16
        %v353 = vrot.slane %v351, 1
        %v354 = vsel %vm318, %v349, %v353
        %v356 = vshrl.u32 %v289, 16
        %v358 = vshll.u32 %v289, 16
        %v360 = vrot.slane %v358, 1
        %v361 = vor.u32 %v356, %v360
        %v363 = vshll.u32 %v313, 16
        %v365 = vrot.slane %v363, 1
        %v366 = vsel %vm318, %v361, %v365
        %v368 = vshrl.u32 %v290, 16
        %v370 = vshll.u32 %v290, 16
        %v372 = vrot.slane %v370, 1
        %v373 = vor.u32 %v368, %v372
        %v375 = vshll.u32 %v314, 16
        %v377 = vrot.slane %v375, 1
        %v378 = vsel %vm318, %v373, %v377
        %v380 = vshrl.u32 %v291, 16
        %v382 = vshll.u32 %v291, 16
        %v384 = vrot.slane %v382, 1
        %v385 = vor.u32 %v380, %v384
        %v387 = vshll.u32 %v315, 16
        %v389 = vrot.slane %v387, 1
        %v390 = vsel %vm318, %v385, %v389
        %v392 = vshrl.u32 %v292, 16
        %v394 = vshll.u32 %v292, 16
        %v396 = vrot.slane %v394, 1
        %v397 = vor.u32 %v392, %v396
        %v399 = vshll.u32 %v316, 16
        %v401 = vrot.slane %v399, 1
        %v402 = vsel %vm318, %v397, %v401
        %v404 = vshrl.u32 %v293, 16
        %v406 = vshll.u32 %v293, 16
        %v408 = vrot.slane %v406, 1
        %v409 = vor.u32 %v404, %v408
        %v411 = vshll.u32 %v317, 16
        %v413 = vrot.slane %v411, 1
        %v414 = vsel %vm318, %v409, %v413
        %415 = vrot.lane.b32.xlu0 %v330, 4
        %v416 = vpop.permute.xlu0 %415
        %417 = vrot.lane.b32.xlu0 %v342, 4
        %v418 = vpop.permute.xlu0 %417
        %419 = vrot.lane.b32.xlu0 %v354, 4
        %v420 = vpop.permute.xlu0 %419
        %421 = vrot.lane.b32.xlu0 %v366, 4
        %v422 = vpop.permute.xlu0 %421
        %423 = vrot.lane.b32.xlu0 %v378, 4
        %v424 = vpop.permute.xlu0 %423
        %425 = vrot.lane.b32.xlu0 %v390, 4
        %v426 = vpop.permute.xlu0 %425
        %427 = vrot.lane.b32.xlu0 %v402, 4
        %v428 = vpop.permute.xlu0 %427
        %429 = vrot.lane.b32.xlu0 %v414, 4
        %v430 = vpop.permute.xlu0 %429
        %vm431 = vcmask 1046528
        %v432 = vrot.slane %v286, 1
        %v433 = vrot.slane %v310, 1
        %v434 = vsel %vm431, %v432, %v433
        %v435 = vrot.slane %v287, 1
        %v436 = vrot.slane %v311, 1
        %v437 = vsel %vm431, %v435, %v436
        %v438 = vrot.slane %v288, 1
        %v439 = vrot.slane %v312, 1
        %v440 = vsel %vm431, %v438, %v439
        %v441 = vrot.slane %v289, 1
        %v442 = vrot.slane %v313, 1
        %v443 = vsel %vm431, %v441, %v442
        %v444 = vrot.slane %v290, 1
        %v445 = vrot.slane %v314, 1
        %v446 = vsel %vm431, %v444, %v445
        %v447 = vrot.slane %v291, 1
        %v448 = vrot.slane %v315, 1
        %v449 = vsel %vm431, %v447, %v448
        %v450 = vrot.slane %v292, 1
        %v451 = vrot.slane %v316, 1
        %v452 = vsel %vm431, %v450, %v451
        %v453 = vrot.slane %v293, 1
        %v454 = vrot.slane %v317, 1
        %v455 = vsel %vm431, %v453, %v454
        %456 = vrot.lane.b32.xlu0 %v434, 8
        %v457 = vpop.permute.xlu0 %456
        %458 = vrot.lane.b32.xlu0 %v437, 8
        %v459 = vpop.permute.xlu0 %458
        %460 = vrot.lane.b32.xlu0 %v440, 8
        %v461 = vpop.permute.xlu0 %460
        %462 = vrot.lane.b32.xlu0 %v443, 8
        %v463 = vpop.permute.xlu0 %462
        %464 = vrot.lane.b32.xlu0 %v446, 8
        %v465 = vpop.permute.xlu0 %464
        %466 = vrot.lane.b32.xlu0 %v449, 8
        %v467 = vpop.permute.xlu0 %466
        %468 = vrot.lane.b32.xlu0 %v452, 8
        %v469 = vpop.permute.xlu0 %468
        %470 = vrot.lane.b32.xlu0 %v455, 8
        %v471 = vpop.permute.xlu0 %470
        %v474 = vunpack.c.l.b16 %v248
        %v475 = vunpack.c.l.b16 %v249
        %v476 = vpack.c.b16 %v475, %v474
        %477 = vrot.lane.b32.xlu0 %v287, 12
        %v478 = vpop.permute.xlu0 %477
        %479 = vrot.lane.b32.xlu0 %v288, 12
        %v480 = vpop.permute.xlu0 %479
        %481 = vrot.lane.b32.xlu0 %v289, 12
        %v482 = vpop.permute.xlu0 %481
        %483 = vrot.lane.b32.xlu0 %v290, 12
        %v484 = vpop.permute.xlu0 %483
        %485 = vrot.lane.b32.xlu0 %v291, 12
        %v486 = vpop.permute.xlu0 %485
        %487 = vrot.lane.b32.xlu0 %v292, 12
        %v488 = vpop.permute.xlu0 %487
        %489 = vrot.lane.b32.xlu0 %v293, 12
        %v490 = vpop.permute.xlu0 %489
        %491 = vrot.lane.b32.xlu0 %v476, 12
        %v492 = vpop.permute.xlu0 %491
        %v494 = vunpack.c.l.b16 %v250
        %v495 = vpack.c.b16 %v494, %v494
        %v497 = vshrl.u32 %v476, 16
        %v499 = vshll.u32 %v476, 16
        %v501 = vrot.slane %v499, 1
        %v502 = vor.u32 %v497, %v501
        %v504 = vshll.u32 %v495, 16
        %v506 = vrot.slane %v504, 1
        %v507 = vsel %vm318, %v502, %v506
        %508 = vrot.lane.b32.xlu0 %v342, 16
        %v509 = vpop.permute.xlu0 %508
        %510 = vrot.lane.b32.xlu0 %v354, 16
        %v511 = vpop.permute.xlu0 %510
        %512 = vrot.lane.b32.xlu0 %v366, 16
        %v513 = vpop.permute.xlu0 %512
        %514 = vrot.lane.b32.xlu0 %v378, 16
        %v515 = vpop.permute.xlu0 %514
        %516 = vrot.lane.b32.xlu0 %v390, 16
        %v517 = vpop.permute.xlu0 %516
        %518 = vrot.lane.b32.xlu0 %v402, 16
        %v519 = vpop.permute.xlu0 %518
        %520 = vrot.lane.b32.xlu0 %v414, 16
        %v521 = vpop.permute.xlu0 %520
        %522 = vrot.lane.b32.xlu0 %v507, 16
        %v523 = vpop.permute.xlu0 %522
        %v524 = vrot.slane %v476, 1
        %v525 = vrot.slane %v495, 1
        %v526 = vsel %vm431, %v524, %v525
        %527 = vrot.lane.b32.xlu0 %v437, 20
        %v528 = vpop.permute.xlu0 %527
        %529 = vrot.lane.b32.xlu0 %v440, 20
        %v530 = vpop.permute.xlu0 %529
        %531 = vrot.lane.b32.xlu0 %v443, 20
        %v532 = vpop.permute.xlu0 %531
        %533 = vrot.lane.b32.xlu0 %v446, 20
        %v534 = vpop.permute.xlu0 %533
        %535 = vrot.lane.b32.xlu0 %v449, 20
        %v536 = vpop.permute.xlu0 %535
        %537 = vrot.lane.b32.xlu0 %v452, 20
        %v538 = vpop.permute.xlu0 %537
        %539 = vrot.lane.b32.xlu0 %v455, 20
        %v540 = vpop.permute.xlu0 %539
        %541 = vrot.lane.b32.xlu0 %v526, 20
        %v542 = vpop.permute.xlu0 %541
        %v545 = vunpack.c.l.b16 %v251
        %v546 = vunpack.c.l.b16 %v252
        %v547 = vpack.c.b16 %v546, %v545
        %548 = vrot.lane.b32.xlu0 %v288, 24
        %v549 = vpop.permute.xlu0 %548
        %550 = vrot.lane.b32.xlu0 %v289, 24
        %v551 = vpop.permute.xlu0 %550
        %552 = vrot.lane.b32.xlu0 %v290, 24
        %v553 = vpop.permute.xlu0 %552
        %554 = vrot.lane.b32.xlu0 %v291, 24
        %v555 = vpop.permute.xlu0 %554
        %556 = vrot.lane.b32.xlu0 %v292, 24
        %v557 = vpop.permute.xlu0 %556
        %558 = vrot.lane.b32.xlu0 %v293, 24
        %v559 = vpop.permute.xlu0 %558
        %560 = vrot.lane.b32.xlu0 %v476, 24
        %v561 = vpop.permute.xlu0 %560
        %562 = vrot.lane.b32.xlu0 %v547, 24
        %v563 = vpop.permute.xlu0 %562
        %v565 = vunpack.c.l.b16 %v253
        %v566 = vpack.c.b16 %v565, %v565
        %v568 = vshrl.u32 %v547, 16
        %v570 = vshll.u32 %v547, 16
        %v572 = vrot.slane %v570, 1
        %v573 = vor.u32 %v568, %v572
        %v575 = vshll.u32 %v566, 16
        %v577 = vrot.slane %v575, 1
        %v578 = vsel %vm318, %v573, %v577
        %579 = vrot.lane.b32.xlu0 %v354, 28
        %v580 = vpop.permute.xlu0 %579
        %581 = vrot.lane.b32.xlu0 %v366, 28
        %v582 = vpop.permute.xlu0 %581
        %583 = vrot.lane.b32.xlu0 %v378, 28
        %v584 = vpop.permute.xlu0 %583
        %585 = vrot.lane.b32.xlu0 %v390, 28
        %v586 = vpop.permute.xlu0 %585
        %587 = vrot.lane.b32.xlu0 %v402, 28
        %v588 = vpop.permute.xlu0 %587
        %589 = vrot.lane.b32.xlu0 %v414, 28
        %v590 = vpop.permute.xlu0 %589
        %591 = vrot.lane.b32.xlu0 %v507, 28
        %v592 = vpop.permute.xlu0 %591
        %593 = vrot.lane.b32.xlu0 %v578, 28
        %v594 = vpop.permute.xlu0 %593
        %v595 = vrot.slane %v547, 1
        %v596 = vrot.slane %v566, 1
        %v597 = vsel %vm431, %v595, %v596
        %598 = vrot.lane.b32.xlu0 %v440, 32
        %v599 = vpop.permute.xlu0 %598
        %600 = vrot.lane.b32.xlu0 %v443, 32
        %v601 = vpop.permute.xlu0 %600
        %602 = vrot.lane.b32.xlu0 %v446, 32
        %v603 = vpop.permute.xlu0 %602
        %604 = vrot.lane.b32.xlu0 %v449, 32
        %v605 = vpop.permute.xlu0 %604
        %606 = vrot.lane.b32.xlu0 %v452, 32
        %v607 = vpop.permute.xlu0 %606
        %608 = vrot.lane.b32.xlu0 %v455, 32
        %v609 = vpop.permute.xlu0 %608
        %610 = vrot.lane.b32.xlu0 %v526, 32
        %v611 = vpop.permute.xlu0 %610
        %612 = vrot.lane.b32.xlu0 %v597, 32
        %v613 = vpop.permute.xlu0 %612
        %vm614 = vcmask 31744
        %v616 = vsel %vm614, %v286, %v416
        %v618 = vsel %vm614, %v287, %v418
        %v620 = vsel %vm614, %v288, %v420
        %v622 = vsel %vm614, %v289, %v422
        %v624 = vsel %vm614, %v290, %v424
        %v626 = vsel %vm614, %v291, %v426
        %v628 = vsel %vm614, %v292, %v428
        %v630 = vsel %vm614, %v293, %v430
        %vm631 = vcmask 64512
        %v633 = vsel %vm631, %v616, %v457
        %v635 = vsel %vm631, %v618, %v459
        %v637 = vsel %vm631, %v620, %v461
        %v639 = vsel %vm631, %v622, %v463
        %v641 = vsel %vm631, %v624, %v465
        %v643 = vsel %vm631, %v626, %v467
        %v645 = vsel %vm631, %v628, %v469
        %v647 = vsel %vm631, %v630, %v471
        %vm648 = vcmask 97280
        %v650 = vsel %vm648, %v633, %v478
        %v652 = vsel %vm648, %v635, %v480
        %v654 = vsel %vm648, %v637, %v482
        %v656 = vsel %vm648, %v639, %v484
        %v658 = vsel %vm648, %v641, %v486
        %v660 = vsel %vm648, %v643, %v488
        %v662 = vsel %vm648, %v645, %v490
        %v664 = vsel %vm648, %v647, %v492
        %vm665 = vcmask 130048
        %v667 = vsel %vm665, %v650, %v509
        %v669 = vsel %vm665, %v652, %v511
        %v671 = vsel %vm665, %v654, %v513
        %v673 = vsel %vm665, %v656, %v515
        %v675 = vsel %vm665, %v658, %v517
        %v677 = vsel %vm665, %v660, %v519
        %v679 = vsel %vm665, %v662, %v521
        %v681 = vsel %vm665, %v664, %v523
        %vm682 = vcmask 162816
        %v684 = vsel %vm682, %v667, %v528
        %v686 = vsel %vm682, %v669, %v530
        %v688 = vsel %vm682, %v671, %v532
        %v690 = vsel %vm682, %v673, %v534
        %v692 = vsel %vm682, %v675, %v536
        %v694 = vsel %vm682, %v677, %v538
        %v696 = vsel %vm682, %v679, %v540
        %v698 = vsel %vm682, %v681, %v542
        %vm699 = vcmask 195584
        %v701 = vsel %vm699, %v684, %v549
        %v703 = vsel %vm699, %v686, %v551
        %v705 = vsel %vm699, %v688, %v553
        %v707 = vsel %vm699, %v690, %v555
        %v709 = vsel %vm699, %v692, %v557
        %v711 = vsel %vm699, %v694, %v559
        %v713 = vsel %vm699, %v696, %v561
        %v715 = vsel %vm699, %v698, %v563
        %vm716 = vcmask 228352
        %v718 = vsel %vm716, %v701, %v580
        %v720 = vsel %vm716, %v703, %v582
        %v722 = vsel %vm716, %v705, %v584
        %v724 = vsel %vm716, %v707, %v586
        %v726 = vsel %vm716, %v709, %v588
        %v728 = vsel %vm716, %v711, %v590
        %v730 = vsel %vm716, %v713, %v592
        %v732 = vsel %vm716, %v715, %v594
        %vm733 = vcmask 261120
        %v735 = vsel %vm733, %v718, %v599
        %v737 = vsel %vm733, %v720, %v601
        %v739 = vsel %vm733, %v722, %v603
        %v741 = vsel %vm733, %v724, %v605
        %v743 = vsel %vm733, %v726, %v607
        %v745 = vsel %vm733, %v728, %v609
        %v747 = vsel %vm733, %v730, %v611
        %v749 = vsel %vm733, %v732, %v613
        %vm750 = vcmask 293888
        %v752 = vsel %vm750, %v735, 0
        %v754 = vsel %vm750, %v737, 0
        %v756 = vsel %vm750, %v739, 0
        %v758 = vsel %vm750, %v741, 0
        %v760 = vsel %vm750, %v743, 0
        %v762 = vsel %vm750, %v745, 0
        %v764 = vsel %vm750, %v747, 0
        %v766 = vsel %vm750, %v749, 0
        %v768 = vld [vmem:[%s1] sm:$0xf]
        %v769 = vld [vmem:[%s1 + $0x4] sm:$0xf]
        %v770 = vld [vmem:[%s1 + $0x8] sm:$0xf]
        %v771 = vld [vmem:[%s1 + $0xc] sm:$0xf]
        %v772 = vld [vmem:[%s1 + $0x10] sm:$0xf]
        %v773 = vld [vmem:[%s1 + $0x14] sm:$0xf]
        %v774 = vld [vmem:[%s1 + $0x18] sm:$0xf]
        %v775 = vld [vmem:[%s1 + $0x1c] sm:$0xf]
        %v776 = vld [vmem:[%s1 + $0x20] sm:$0xf]
        %v777 = vld [vmem:[%s1 + $0x24] sm:$0xf]
        %v778 = vld [vmem:[%s1 + $0x28] sm:$0xf]
        %v779 = vld [vmem:[%s1 + $0x2c] sm:$0xf]
        %v780 = vld [vmem:[%s1 + $0x30] sm:$0xf]
        %v781 = vld [vmem:[%s1 + $0x34] sm:$0xf]
        %v782 = vld [vmem:[%s1 + $0x38] sm:$0xf]
        %v783 = vld [vmem:[%s1 + $0x3c] sm:$0xf]
        %v800 = vunpack.c.l.b16 %v768
        %v801 = vunpack.c.l.b16 %v769
        %v802 = vunpack.c.l.b16 %v770
        %v803 = vunpack.c.l.b16 %v771
        %v804 = vunpack.c.l.b16 %v772
        %v805 = vunpack.c.l.b16 %v773
        %v806 = vunpack.c.l.b16 %v774
        %v807 = vunpack.c.l.b16 %v775
        %v808 = vunpack.c.l.b16 %v776
        %v809 = vunpack.c.l.b16 %v777
        %v810 = vunpack.c.l.b16 %v778
        %v811 = vunpack.c.l.b16 %v779
        %v812 = vunpack.c.l.b16 %v780
        %v813 = vunpack.c.l.b16 %v781
        %v814 = vunpack.c.l.b16 %v782
        %v815 = vunpack.c.l.b16 %v783
        %v816 = vpack.c.b16 %v801, %v800
        %v817 = vpack.c.b16 %v803, %v802
        %v818 = vpack.c.b16 %v805, %v804
        %v819 = vpack.c.b16 %v807, %v806
        %v820 = vpack.c.b16 %v809, %v808
        %v821 = vpack.c.b16 %v811, %v810
        %v822 = vpack.c.b16 %v813, %v812
        %v823 = vpack.c.b16 %v815, %v814
        %832 = vmatprep.subr.bf16.mxu0 0
        %833 = vmatpush1.bf16.msra.mxu0 %v823
        %834 = vmatprep.subr.bf16.mxu0 0
        %835 = vmatpush1.bf16.msra.mxu0 %v822
        %836 = vmatprep.subr.bf16.mxu0 0
        %837 = vmatpush1.bf16.msra.mxu0 %v821
        %838 = vmatprep.subr.bf16.mxu0 0
        %839 = vmatpush1.bf16.msra.mxu0 %v820
        %840 = vmatprep.subr.bf16.mxu0 0
        %841 = vmatpush1.bf16.msra.mxu0 %v819
        %842 = vmatprep.subr.bf16.mxu0 0
        %843 = vmatpush1.bf16.msra.mxu0 %v818
        %844 = vmatprep.subr.bf16.mxu0 0
        %845 = vmatpush1.bf16.msra.mxu0 %v817
        %846 = vmatprep.subr.bf16.mxu0 0
        %847 = vmatpush1.bf16.msra.mxu0 %v816
        %848 = vmatprep.subr.bf16.mxu0 0
        %849 = vmatpush2.bf16.msra.mxu0 0
        %850 = vmatprep.subr.bf16.mxu0 0
        %851 = vmatpush2.bf16.msra.mxu0 0
        %852 = vmatprep.subr.bf16.mxu0 0
        %853 = vmatpush2.bf16.msra.mxu0 0
        %854 = vmatprep.subr.bf16.mxu0 0
        %855 = vmatpush2.bf16.msra.mxu0 0
        %856 = vmatprep.subr.bf16.mxu0 0
        %857 = vmatpush2.bf16.msra.mxu0 0
        %858 = vmatprep.subr.bf16.mxu0 0
        %859 = vmatpush2.bf16.msra.mxu0 0
        %860 = vmatprep.subr.bf16.mxu0 0
        %861 = vmatpush2.bf16.msra.mxu0 0
        %862 = vmatprep.subr.bf16.mxu0 0
        %863 = vmatpush2.bf16.msra.mxu0 0
        %864 = vmatprep.mubr.bf16.mxu0 0
        %865 = vmatmul.mubr.bf16.gmra.mxu0 %v752
        %v866 = vpop.f32.mrf.mxu0
        %v867 = vadd.f32 0.0, %v866
        %v868 = vpop.f32.mrf.mxu0
        %v869 = vpop.f32.mrf.mxu0
        %v870 = vadd.f32 0.0, %v869
        %v871 = vpop.f32.mrf.mxu0
        %872 = vmatprep.mubr.bf16.mxu0 0
        %873 = vmatmul.mubr.bf16.gmra.mxu0 %v754
        %v874 = vpop.f32.mrf.mxu0
        %v875 = vadd.f32 0.0, %v874
        %v876 = vpop.f32.mrf.mxu0
        %v877 = vpop.f32.mrf.mxu0
        %v878 = vadd.f32 0.0, %v877
        %v879 = vpop.f32.mrf.mxu0
        %880 = vmatprep.mubr.bf16.mxu0 0
        %881 = vmatmul.mubr.bf16.gmra.mxu0 %v756
        %v882 = vpop.f32.mrf.mxu0
        %v883 = vadd.f32 0.0, %v882
        %v884 = vpop.f32.mrf.mxu0
        %v885 = vpop.f32.mrf.mxu0
        %v886 = vadd.f32 0.0, %v885
        %v887 = vpop.f32.mrf.mxu0
        %888 = vmatprep.mubr.bf16.mxu0 0
        %889 = vmatmul.mubr.bf16.gmra.mxu0 %v758
        %v890 = vpop.f32.mrf.mxu0
        %v891 = vadd.f32 0.0, %v890
        %v892 = vpop.f32.mrf.mxu0
        %v893 = vpop.f32.mrf.mxu0
        %v894 = vadd.f32 0.0, %v893
        %v895 = vpop.f32.mrf.mxu0
        %896 = vmatprep.mubr.bf16.mxu0 0
        %897 = vmatmul.mubr.bf16.gmra.mxu0 %v760
        %v898 = vpop.f32.mrf.mxu0
        %v899 = vadd.f32 0.0, %v898
        %v900 = vpop.f32.mrf.mxu0
        %v901 = vpop.f32.mrf.mxu0
        %v902 = vadd.f32 0.0, %v901
        %v903 = vpop.f32.mrf.mxu0
        %904 = vmatprep.mubr.bf16.mxu0 0
        %905 = vmatmul.mubr.bf16.gmra.mxu0 %v762
        %v906 = vpop.f32.mrf.mxu0
        %v907 = vadd.f32 0.0, %v906
        %v908 = vpop.f32.mrf.mxu0
        %v909 = vpop.f32.mrf.mxu0
        %v910 = vadd.f32 0.0, %v909
        %v911 = vpop.f32.mrf.mxu0
        %912 = vmatprep.mubr.bf16.mxu0 0
        %913 = vmatmul.mubr.bf16.gmra.mxu0 %v764
        %v914 = vpop.f32.mrf.mxu0
        %v915 = vadd.f32 0.0, %v914
        %v916 = vpop.f32.mrf.mxu0
        %v917 = vpop.f32.mrf.mxu0
        %v918 = vadd.f32 0.0, %v917
        %v919 = vpop.f32.mrf.mxu0
        %920 = vmatprep.mubr.bf16.mxu0 0
        %921 = vmatmul.mubr.bf16.gmra.mxu0 %v766
        %v922 = vpop.f32.mrf.mxu0
        %v923 = vadd.f32 0.0, %v922
        %v924 = vpop.f32.mrf.mxu0
        %v925 = vpop.f32.mrf.mxu0
        %v926 = vadd.f32 0.0, %v925
        %v927 = vpop.f32.mrf.mxu0
        %928 = vdwg.mxu0
        %v929 = vld [vmem:[%s220] sm:$0xf]
        %v930 = vld [vmem:[%s220 + $0x4] sm:$0xf]
        %v931 = vld [vmem:[%s220 + $0x8] sm:$0xf]
        %v932 = vld [vmem:[%s220 + $0xc] sm:$0xf]
        %v933 = vld [vmem:[%s220 + $0x10] sm:$0xf]
        %v934 = vld [vmem:[%s220 + $0x14] sm:$0xf]
        %v935 = vld [vmem:[%s220 + $0x18] sm:$0xf]
        %v936 = vld [vmem:[%s220 + $0x1c] sm:$0xf]
        %v937 = vld [vmem:[%s220 + $0x20] sm:$0xf]
        %v938 = vld [vmem:[%s220 + $0x24] sm:$0xf]
        %v939 = vld [vmem:[%s220 + $0x28] sm:$0xf]
        %v940 = vld [vmem:[%s220 + $0x2c] sm:$0xf]
        %v941 = vld [vmem:[%s220 + $0x30] sm:$0xf]
        %v942 = vld [vmem:[%s220 + $0x34] sm:$0xf]
        %v943 = vld [vmem:[%s220 + $0x38] sm:$0xf]
        %v944 = vld [vmem:[%s220 + $0x3c] sm:$0xf]
        %v945 = vunpack.c.l.bf16 %v929
        %v946 = vunpack.c.l.bf16 %v930
        %v947 = vunpack.c.l.bf16 %v931
        %v948 = vunpack.c.l.bf16 %v932
        %v949 = vunpack.c.l.bf16 %v933
        %v950 = vunpack.c.l.bf16 %v934
        %v951 = vunpack.c.l.bf16 %v935
        %v952 = vunpack.c.l.bf16 %v936
        %v953 = vunpack.c.l.bf16 %v937
        %v954 = vunpack.c.l.bf16 %v938
        %v955 = vunpack.c.l.bf16 %v939
        %v956 = vunpack.c.l.bf16 %v940
        %v957 = vunpack.c.l.bf16 %v941
        %v958 = vunpack.c.l.bf16 %v942
        %v959 = vunpack.c.l.bf16 %v943
        %v960 = vunpack.c.l.bf16 %v944
        %v961 = vadd.f32 %v867, %v945
        %v962 = vadd.f32 %v870, %v946
        %v963 = vadd.f32 %v875, %v947
        %v964 = vadd.f32 %v878, %v948
        %v965 = vadd.f32 %v883, %v949
        %v966 = vadd.f32 %v886, %v950
        %v967 = vadd.f32 %v891, %v951
        %v968 = vadd.f32 %v894, %v952
        %v969 = vadd.f32 %v899, %v953
        %v970 = vadd.f32 %v902, %v954
        %v971 = vadd.f32 %v907, %v955
        %v972 = vadd.f32 %v910, %v956
        %v973 = vadd.f32 %v915, %v957
        %v974 = vadd.f32 %v918, %v958
        %v975 = vadd.f32 %v923, %v959
        %v976 = vadd.f32 %v926, %v960
        %vm977 = vcmp.ge.f32.partialorder %v961, 0.0
        %vm978 = vcmp.ge.f32.partialorder %v962, 0.0
        %vm979 = vcmp.ge.f32.partialorder %v963, 0.0
        %vm980 = vcmp.ge.f32.partialorder %v964, 0.0
        %vm981 = vcmp.ge.f32.partialorder %v965, 0.0
        %vm982 = vcmp.ge.f32.partialorder %v966, 0.0
        %vm983 = vcmp.ge.f32.partialorder %v967, 0.0
        %vm984 = vcmp.ge.f32.partialorder %v968, 0.0
        %vm985 = vcmp.ge.f32.partialorder %v969, 0.0
        %vm986 = vcmp.ge.f32.partialorder %v970, 0.0
        %vm987 = vcmp.ge.f32.partialorder %v971, 0.0
        %vm988 = vcmp.ge.f32.partialorder %v972, 0.0
        %vm989 = vcmp.ge.f32.partialorder %v973, 0.0
        %vm990 = vcmp.ge.f32.partialorder %v974, 0.0
        %vm991 = vcmp.ge.f32.partialorder %v975, 0.0
        %vm992 = vcmp.ge.f32.partialorder %v976, 0.0
        %v993 = vmul.f32 %v961, 0.1
        %v994 = vmul.f32 %v962, 0.1
        %v995 = vmul.f32 %v963, 0.1
        %v996 = vmul.f32 %v964, 0.1
        %v997 = vmul.f32 %v965, 0.1
        %v998 = vmul.f32 %v966, 0.1
        %v999 = vmul.f32 %v967, 0.1
        %v1000 = vmul.f32 %v968, 0.1
        %v1001 = vmul.f32 %v969, 0.1
        %v1002 = vmul.f32 %v970, 0.1
        %v1003 = vmul.f32 %v971, 0.1
        %v1004 = vmul.f32 %v972, 0.1
        %v1005 = vmul.f32 %v973, 0.1
        %v1006 = vmul.f32 %v974, 0.1
        %v1007 = vmul.f32 %v975, 0.1
        %v1008 = vmul.f32 %v976, 0.1
        %v1009 = vsel %vm977, %v961, %v993
        %v1010 = vsel %vm978, %v962, %v994
        %v1011 = vsel %vm979, %v963, %v995
        %v1012 = vsel %vm980, %v964, %v996
        %v1013 = vsel %vm981, %v965, %v997
        %v1014 = vsel %vm982, %v966, %v998
        %v1015 = vsel %vm983, %v967, %v999
        %v1016 = vsel %vm984, %v968, %v1000
        %v1017 = vsel %vm985, %v969, %v1001
        %v1018 = vsel %vm986, %v970, %v1002
        %v1019 = vsel %vm987, %v971, %v1003
        %v1020 = vsel %vm988, %v972, %v1004
        %v1021 = vsel %vm989, %v973, %v1005
        %v1022 = vsel %vm990, %v974, %v1006
        %v1023 = vsel %vm991, %v975, %v1007
        %v1024 = vsel %vm992, %v976, %v1008
        %1025 = vst [vmem:[%s205] sm:$0xff] %v1009
        %1026 = vst [vmem:[%s205 + $0x8] sm:$0xff] %v1010
        %1027 = vst [vmem:[%s205 + $0x10] sm:$0xff] %v1011
        %1028 = vst [vmem:[%s205 + $0x18] sm:$0xff] %v1012
        %1029 = vst [vmem:[%s205 + $0x20] sm:$0xff] %v1013
        %1030 = vst [vmem:[%s205 + $0x28] sm:$0xff] %v1014
        %1031 = vst [vmem:[%s205 + $0x30] sm:$0xff] %v1015
        %1032 = vst [vmem:[%s205 + $0x38] sm:$0xff] %v1016
        %1033 = vst [vmem:[%s205 + $0x40] sm:$0xff] %v1017
        %1034 = vst [vmem:[%s205 + $0x48] sm:$0xff] %v1018
        %1035 = vst [vmem:[%s205 + $0x50] sm:$0xff] %v1019
        %1036 = vst [vmem:[%s205 + $0x58] sm:$0xff] %v1020
        %1037 = vst [vmem:[%s205 + $0x60] sm:$0xff] %v1021
        %1038 = vst [vmem:[%s205 + $0x68] sm:$0xff] %v1022
        %1039 = vst [vmem:[%s205 + $0x70] sm:$0xff] %v1023
        %1040 = vst [vmem:[%s205 + $0x78] sm:$0xff] %v1024
        %s1041 = sand.u32 %s116, 1
        %s1042 = scalar_lea.sflag [#allocation3], %s1041
        %s1043 = sand.u32 %s116, 1
        %s1044 = smul.addr %s1043, 128
        %s1045 = scalar_lea.vmem [#allocation2], %s1044
        // Predicated region
        $region33: #{tpu_custom_call.1} parent=31 // pred_check
          %p1046 = pneg %p126
        $region34: #{tpu_custom_call.1} parent=31 // pred_check_branch
          %1048 = sbr.rel (%p1046) target = $region36
        $region35: #{tpu_custom_call.1} parent=31 // pred_region
          %s1049 = smul.u32 8, %s21
          %s1051 = ssub.s32 2048, 2048
          %1052 = vsyncadd %s1042, %s1051
          %s1053 = smul.addr %s1049, 2
          %s1054 = smul.addr %s22, 32
          %s1055 = sadd.s32 %s1053, %s1054
          %s1056 = smul.addr %s1055, 128
          %s1057 = scalar_lea.hbm %s3, %s1056
          %s1058 = sshll.u32 %s1045, 4
          %s1059 = int_to_ptr.vmem [resolvable:$true] %s1058
          %1064 = dma.vmem_to_hbm [thread:$0]  %s1059, 2048, %s1057, %s1042, 128, 128, 8
        $region36: #{tpu_custom_call.1} parent=31 // pred_fallthru
          _
      $region32: #{tpu_custom_call.1} parent=5 // pred_fallthru
        _
      %p1065 = scmp.le.s32.totalorder 2, %s12
      // Predicated region
      $region37: #{tpu_custom_call.1} parent=5 // pred_check
        %p1066 = pneg %p1065
      $region38: #{tpu_custom_call.1} parent=5 // pred_check_branch
        %1068 = sbr.rel (%p1066) target = $region40
      $region39: #{tpu_custom_call.1} parent=5 // pred_region
        %s1069 = ssub.s32 %s12, 2
        // Predicated region
        $region41: #{tpu_custom_call.1} parent=39 // pred_check
          %p1070 = pneg %p132
        $region42: #{tpu_custom_call.1} parent=39 // pred_check_branch
          %1072 = sbr.rel (%p1070) target = $region44
        $region43: #{tpu_custom_call.1} parent=39 // pred_region
          %s1073 = sand.u32 %s117, 1
          %s1074 = scalar_lea.sflag [#allocation3], %s1073
          %s1075 = sand.u32 %s117, 1
          %s1076 = smul.addr %s1075, 128
          %s1077 = scalar_lea.vmem [#allocation2], %s1076
          %1078 = dma.done %s1074, 2048
        $region44: #{tpu_custom_call.1} parent=39 // pred_fallthru
          _
      $region40: #{tpu_custom_call.1} parent=5 // pred_fallthru
        _
    $region6: #{tpu_custom_call.1} parent=1 // loop_footer
      %s16 = sadd.s32 1, %s12
    $region7: #{tpu_custom_call.1} parent=1 // loop_footer_branch
      %11 = sbr.rel target = $region3
    $region8: #{tpu_custom_call.1} parent=1 // loop_exit
      _
    %1079 = vsyncpa [#allocation3], 1
    %s1080 = scalar_lea.sflag [#allocation3], 1
    %1081 = vsyncpa %s1080, 1

</llo_original>
